<compile_context>
chip_gen: v5e
topology: v5e:2x2
jax: 0.10.0
libtpu: 0.0.40
codegen_flags: <defaults>
</compile_context>

<pallas_src>
import functools

import jax
import jax.numpy as jnp
from jax.experimental import pallas as pl
from jax.experimental.pallas import tpu as pltpu

_LANE = 128


def _nsl_kernel(iv_ref, ov_ref, noise_ref, loss_ref, *, n_neg, e_pad):
    """One grid step = `block_b` batch rows; writes per-row loss (block_b, 1) f32."""
    iv = iv_ref[...]                      # (block_b, E_pad), native dtype
    ov = ov_ref[...]                      # (block_b, E_pad), native dtype

    use_mxu = iv.dtype != jnp.float32
    ones_col = jnp.ones((e_pad, 1), dtype=iv.dtype) if use_mxu else None

    def row_score(prod):
        # E-reduction of a (block_b, E_pad) product -> (block_b, 1) f32 score.
        if use_mxu:
            # bf16 multiply + MXU ones-reduce with f32 accumulation: keeps the
            # reduction off the XLU on the bandwidth-critical bf16 path.
            return jnp.dot(prod, ones_col, preferred_element_type=jnp.float32)
        # f32 inputs: exact f32 lane reduce (HBM bytes are 2x here, XLU has slack).
        return jnp.sum(prod, axis=-1, keepdims=True)

    # Positive score + N negative scores. Negative sign is folded on the tiny
    # (block_b, 1) score, never on the streamed (block_b, N*E_pad) noise tile.
    cols = [row_score(ov * iv)]
    for n in range(n_neg):
        # Static, 128-aligned lane slice of the sublane-dense noise block.
        nv_n = noise_ref[:, pl.ds(n * e_pad, e_pad)]
        cols.append(-row_score(nv_n * iv))
    scores = jnp.concatenate(cols, axis=-1)          # (block_b, n_neg + 1), f32

    # One batched, numerically stable log-sigmoid over all n_neg+1 scores:
    #   log(sigmoid(x)) = min(x, 0) - log(1 + exp(-|x|))
    ls = jnp.minimum(scores, 0.0) - jnp.log(1.0 + jnp.exp(-jnp.abs(scores)))
    loss_ref[...] = jnp.sum(ls, axis=-1, keepdims=True)


@functools.lru_cache(maxsize=None)
def _tpu_vmem_limit_bytes():
    """Per-generation scoped-VMEM limit (64 MiB on v5e/v6e, 40 MiB on v7x)."""
    cap = None
    try:
        info = pltpu.get_tpu_info()
        cap = getattr(info, "vmem_capacity_bytes", None)
    except Exception:
        cap = None
    if cap is None:
        return 32 * 1024 * 1024                       # conservative fallback
    if cap >= 128 * 1024 * 1024:                      # v5e / v6e: 128 MiB physical
        return 64 * 1024 * 1024
    return 40 * 1024 * 1024                           # v7x: 64 MiB physical / TC


def _pick_block_b(batch, n_neg, e_pad, itemsize, pack, *,
                  target_noise_bytes=4 << 20,
                  min_noise_bytes=1 << 20,
                  footprint_cap_bytes=24 << 20):
    """Byte-driven block size: ~2-4 MiB of noise per step, double-buffered
    footprint <= footprint_cap (safe even on v7x), rows a multiple of the
    dtype sublane pack."""
    noise_row = max(1, n_neg * e_pad * itemsize)
    # Double-buffered pipelined streams (noise + input/output vectors + loss)
    # plus a rough allowance for f32 temporaries inside the kernel.
    row_footprint = 2 * ((n_neg + 2) * e_pad * itemsize + 4) + 4 * e_pad * 4
    cap = max(pack, footprint_cap_bytes // row_footprint)
    want = max(pack, target_noise_bytes // noise_row)
    block = min(want, cap)
    if batch <= block:
        return batch                                  # single full-batch block
    # Keep >= 4 grid steps (pipelining + megacore sharding) as long as each
    # step still streams >= ~1 MiB of noise.
    min_rows = max(pack, min_noise_bytes // noise_row)
    while block > min_rows and -(-batch // block) < 4:
        block = max(min_rows, block // 2)
    block = max(pack, (block // pack) * pack)
    # Prefer an exact divisor of the batch (no clipped trailing block) if one
    # is reasonably close; otherwise the cdiv grid handles the ragged tail.
    d = block
    while d >= max(pack, block // 2):
        if batch % d == 0:
            return d
        d -= pack
    return block


def negative_sampling_loss(input_vectors, output_vectors, noise_vectors, *, block_b=None):
    """Pallas implementation of NegativeSamplingLoss.forward."""
    B, E = input_vectors.shape
    Bn, N, En = noise_vectors.shape
    assert Bn == B and En == E, (input_vectors.shape, noise_vectors.shape)

    # Pad the embedding dim to a lane multiple so per-negative slices are free,
    # 128-aligned lane slices (the zero padding contributes 0 to every dot).
    E_pad = ((E + _LANE - 1) // _LANE) * _LANE
    if E_pad != E:
        iv = jnp.pad(input_vectors, ((0, 0), (0, E_pad - E)))
        ov = jnp.pad(output_vectors, ((0, 0), (0, E_pad - E)))
        nv = jnp.pad(noise_vectors, ((0, 0), (0, 0), (0, E_pad - E)))
    else:
        iv, ov, nv = input_vectors, output_vectors, noise_vectors

    # Free layout plumbing: (B, N, E_pad) -> (B, N*E_pad) is a contiguous
    # row-major reshape; the noise tile stays sublane-dense in the kernel.
    noise2d = nv.reshape(B, N * E_pad)

    itemsize = jnp.dtype(noise2d.dtype).itemsize
    pack = max(8, 32 // max(itemsize, 1))             # 8 f32 / 16 bf16 / 32 int8-fp8
    if block_b is None:
        block_b = _pick_block_b(B, N, E_pad, itemsize, pack)
    block_b = int(min(block_b, B))
    if block_b < B:
        block_b = max(8, (block_b // 8) * 8)          # sublane-legal block rows

    grid = pl.cdiv(B, block_b)                        # ragged last block is fine:
                                                      # the math is purely row-local.
    kernel = functools.partial(_nsl_kernel, n_neg=N, e_pad=E_pad)

    per_row = pl.pallas_call(
        kernel,
        out_shape=jax.ShapeDtypeStruct((B, 1), jnp.float32),
        grid_spec=pltpu.PrefetchScalarGridSpec(
            num_scalar_prefetch=0,
            grid=(grid,),
            in_specs=[
                pl.BlockSpec((block_b, E_pad), lambda i: (i, 0)),
                pl.BlockSpec((block_b, E_pad), lambda i: (i, 0)),
                pl.BlockSpec((block_b, N * E_pad), lambda i: (i, 0)),
            ],
            out_specs=pl.BlockSpec((block_b, 1), lambda i: (i, 0)),
        ),
        compiler_params=pltpu.CompilerParams(
            dimension_semantics=("parallel",),        # batch rows are independent
            vmem_limit_bytes=_tpu_vmem_limit_bytes(),
        ),
    )(iv, ov, noise2d)

    # Tiny epilogue in the wrapper keeps the grid axis fully parallel.
    return -jnp.mean(per_row)


def _reference_loss(input_vectors, output_vectors, noise_vectors):
    """Pure-JAX reference mirroring the PyTorch forward (stable log-sigmoid)."""
    iv = input_vectors.astype(jnp.float32)
    ov = output_vectors.astype(jnp.float32)
    nv = noise_vectors.astype(jnp.float32)
    hi = jax.lax.Precision.HIGHEST
    pos = jnp.einsum("be,be->b", ov, iv, precision=hi)
    out_loss = jax.nn.log_sigmoid(pos)
    neg = jnp.einsum("bne,be->bn", nv, iv, precision=hi)
    noise_loss = jnp.sum(jax.nn.log_sigmoid(-neg), axis=1)
    return -jnp.mean(out_loss + noise_loss)


if __name__ == "__main__":
    key = jax.random.PRNGKey(0)

    # (batch, embed, n_neg, explicit block_b, dtype)
    cases = [
        (8, 128, 5, None, jnp.float32),        # single-block f32
        (64, 128, 5, 16, jnp.float32),         # multi-step pipelined grid
        (24, 96, 3, 16, jnp.float32),          # ragged last block + E padded to 128
        (64, 128, 5, 16, jnp.bfloat16),        # bf16 streaming, bf16 mul + MXU reduce
    ]
    for (B, E, N, bb, dt) in cases:
        key, k1, k2, k3 = jax.random.split(key, 4)
        iv = (jax.random.normal(k1, (B, E), dtype=jnp.float32) * 0.1).astype(dt)
        ov = (jax.random.normal(k2, (B, E), dtype=jnp.float32) * 0.1).astype(dt)
        nv = (jax.random.normal(k3, (B, N, E), dtype=jnp.float32) * 0.1).astype(dt)

        loss = jax.block_until_ready(negative_sampling_loss(iv, ov, nv, block_b=bb))
        ref = _reference_loss(iv, ov, nv)
        tol = 2e-2 if dt == jnp.bfloat16 else 1e-4
        assert jnp.allclose(loss, ref, rtol=tol, atol=tol), (
            B, E, N, str(dt), float(loss), float(ref))

    print("KERNEL_OK")
</pallas_src>

<mosaic_0001>
module attributes {stable_mosaic.version = 11 : i64} {
  func.func @_nsl_kernel(%arg0: i32, %arg1: memref<8x128xf32, #tpu.memory_space<vmem>>, %arg2: memref<8x128xf32, #tpu.memory_space<vmem>>, %arg3: memref<8x640xf32, #tpu.memory_space<vmem>>, %arg4: memref<8x1xf32, #tpu.memory_space<vmem>>) attributes {dimension_semantics = [#tpu.dimension_semantics<parallel>], iteration_bounds = array<i64: 1>, scalar_prefetch = 0 : i64, scratch_operands = 0 : i64, tpu.core_type = #tpu.core_type<tc>, window_params = [{transform_indices = @transform_0, window_bounds = array<i64: 8, 128>}, {transform_indices = @transform_1, window_bounds = array<i64: 8, 128>}, {transform_indices = @transform_2, window_bounds = array<i64: 8, 640>}, {transform_indices = @transform_3, window_bounds = array<i64: 8, 1>}]} {
    %c0 = arith.constant 0 : index
    %c0_0 = arith.constant 0 : index
    %0 = vector.load %arg1[%c0, %c0_0] : memref<8x128xf32, #tpu.memory_space<vmem>>, vector<8x128xf32>
    %c0_1 = arith.constant 0 : index
    %c0_2 = arith.constant 0 : index
    %1 = vector.load %arg2[%c0_1, %c0_2] : memref<8x128xf32, #tpu.memory_space<vmem>>, vector<8x128xf32>
    %2 = arith.mulf %1, %0 : vector<8x128xf32>
    %cst = arith.constant dense<0.000000e+00> : vector<8xf32>
    %3 = vector.multi_reduction <add>, %2, %cst [1] : vector<8x128xf32> to vector<8xf32>
    %4 = vector.shape_cast %3 : vector<8xf32> to vector<8x1xf32>
    %c0_3 = arith.constant 0 : index
    %c0_4 = arith.constant 0 : index
    %5 = vector.load %arg3[%c0_3, %c0_4] : memref<8x640xf32, #tpu.memory_space<vmem>>, vector<8x128xf32>
    %6 = arith.mulf %5, %0 : vector<8x128xf32>
    %cst_5 = arith.constant dense<0.000000e+00> : vector<8xf32>
    %7 = vector.multi_reduction <add>, %6, %cst_5 [1] : vector<8x128xf32> to vector<8xf32>
    %8 = vector.shape_cast %7 : vector<8xf32> to vector<8x1xf32>
    %cst_6 = arith.constant 0.000000e+00 : f32
    %9 = vector.broadcast %cst_6 : f32 to vector<8x1xf32>
    %10 = arith.subf %9, %8 : vector<8x1xf32>
    %c0_7 = arith.constant 0 : index
    %c128 = arith.constant 128 : index
    %11 = vector.load %arg3[%c0_7, %c128] : memref<8x640xf32, #tpu.memory_space<vmem>>, vector<8x128xf32>
    %12 = arith.mulf %11, %0 : vector<8x128xf32>
    %cst_8 = arith.constant dense<0.000000e+00> : vector<8xf32>
    %13 = vector.multi_reduction <add>, %12, %cst_8 [1] : vector<8x128xf32> to vector<8xf32>
    %14 = vector.shape_cast %13 : vector<8xf32> to vector<8x1xf32>
    %cst_9 = arith.constant 0.000000e+00 : f32
    %15 = vector.broadcast %cst_9 : f32 to vector<8x1xf32>
    %16 = arith.subf %15, %14 : vector<8x1xf32>
    %c0_10 = arith.constant 0 : index
    %c256 = arith.constant 256 : index
    %17 = vector.load %arg3[%c0_10, %c256] : memref<8x640xf32, #tpu.memory_space<vmem>>, vector<8x128xf32>
    %18 = arith.mulf %17, %0 : vector<8x128xf32>
    %cst_11 = arith.constant dense<0.000000e+00> : vector<8xf32>
    %19 = vector.multi_reduction <add>, %18, %cst_11 [1] : vector<8x128xf32> to vector<8xf32>
    %20 = vector.shape_cast %19 : vector<8xf32> to vector<8x1xf32>
    %cst_12 = arith.constant 0.000000e+00 : f32
    %21 = vector.broadcast %cst_12 : f32 to vector<8x1xf32>
    %22 = arith.subf %21, %20 : vector<8x1xf32>
    %c0_13 = arith.constant 0 : index
    %c384 = arith.constant 384 : index
    %23 = vector.load %arg3[%c0_13, %c384] : memref<8x640xf32, #tpu.memory_space<vmem>>, vector<8x128xf32>
    %24 = arith.mulf %23, %0 : vector<8x128xf32>
    %cst_14 = arith.constant dense<0.000000e+00> : vector<8xf32>
    %25 = vector.multi_reduction <add>, %24, %cst_14 [1] : vector<8x128xf32> to vector<8xf32>
    %26 = vector.shape_cast %25 : vector<8xf32> to vector<8x1xf32>
    %cst_15 = arith.constant 0.000000e+00 : f32
    %27 = vector.broadcast %cst_15 : f32 to vector<8x1xf32>
    %28 = arith.subf %27, %26 : vector<8x1xf32>
    %c0_16 = arith.constant 0 : index
    %c512 = arith.constant 512 : index
    %29 = vector.load %arg3[%c0_16, %c512] : memref<8x640xf32, #tpu.memory_space<vmem>>, vector<8x128xf32>
    %30 = arith.mulf %29, %0 : vector<8x128xf32>
    %cst_17 = arith.constant dense<0.000000e+00> : vector<8xf32>
    %31 = vector.multi_reduction <add>, %30, %cst_17 [1] : vector<8x128xf32> to vector<8xf32>
    %32 = vector.shape_cast %31 : vector<8xf32> to vector<8x1xf32>
    %cst_18 = arith.constant 0.000000e+00 : f32
    %33 = vector.broadcast %cst_18 : f32 to vector<8x1xf32>
    %34 = arith.subf %33, %32 : vector<8x1xf32>
    %35 = tpu.concatenate %4, %10, %16, %22, %28, %34 in 1 : vector<8x1xf32>, vector<8x1xf32>, vector<8x1xf32>, vector<8x1xf32>, vector<8x1xf32>, vector<8x1xf32> -> vector<8x6xf32>
    %cst_19 = arith.constant 0.000000e+00 : f32
    %36 = vector.broadcast %cst_19 : f32 to vector<8x6xf32>
    %37 = arith.minimumf %35, %36 : vector<8x6xf32>
    %38 = math.absf %35 : vector<8x6xf32>
    %cst_20 = arith.constant 0.000000e+00 : f32
    %39 = vector.broadcast %cst_20 : f32 to vector<8x6xf32>
    %40 = arith.subf %39, %38 : vector<8x6xf32>
    %41 = math.exp %40 : vector<8x6xf32>
    %cst_21 = arith.constant 1.000000e+00 : f32
    %42 = vector.broadcast %cst_21 : f32 to vector<8x6xf32>
    %43 = arith.addf %42, %41 : vector<8x6xf32>
    %44 = math.log %43 : vector<8x6xf32>
    %45 = arith.subf %37, %44 : vector<8x6xf32>
    %cst_22 = arith.constant dense<0.000000e+00> : vector<8xf32>
    %46 = vector.multi_reduction <add>, %45, %cst_22 [1] : vector<8x6xf32> to vector<8xf32>
    %47 = vector.shape_cast %46 : vector<8xf32> to vector<8x1xf32>
    %c0_23 = arith.constant 0 : index
    %c0_24 = arith.constant 0 : index
    %48 = vector.load %arg4[%c0_23, %c0_24] : memref<8x1xf32, #tpu.memory_space<vmem>>, vector<8x1xf32>
    tpu.vector_store %arg4[%c0_23, %c0_24], %47 {strides = array<i32>} : memref<8x1xf32, #tpu.memory_space<vmem>>, vector<8x1xf32>,
    return
  }
  func.func @transform_0(%arg0: i32) -> (i32, i32) {
    %c0_i32 = arith.constant 0 : i32
    %c0_i32_0 = arith.constant 0 : i32
    return %arg0, %c0_i32 : i32, i32
  }
  func.func @transform_1(%arg0: i32) -> (i32, i32) {
    %c0_i32 = arith.constant 0 : i32
    %c0_i32_0 = arith.constant 0 : i32
    return %arg0, %c0_i32 : i32, i32
  }
  func.func @transform_2(%arg0: i32) -> (i32, i32) {
    %c0_i32 = arith.constant 0 : i32
    %c0_i32_0 = arith.constant 0 : i32
    return %arg0, %c0_i32 : i32, i32
  }
  func.func @transform_3(%arg0: i32) -> (i32, i32) {
    %c0_i32 = arith.constant 0 : i32
    %c0_i32_0 = arith.constant 0 : i32
    return %arg0, %c0_i32 : i32, i32
  }
}

</mosaic_0001>

<llo_original>
// kernel: tpu_custom_call.1
$region0: #{tpu_custom_call.1}
  #allocation0 [shape = 'u32[]', space=smem, size = 0x4, offset = 0x4, fixed_abs, tag = 'smem constant byte address 0x4 - core index']
  #allocation1 [shape = 'u32[72,128]{1,0:T(1,128)}', space=vmem, size = 0x9000, scoped, tag = 'internal scratch']
  %s0 = inlined_call_operand.hbm [shape: f32[8,128], index: 0, kind: input, shape index: {}]
  %s1 = inlined_call_operand.hbm [shape: f32[8,128], index: 1, kind: input, shape index: {}]
  %s2 = inlined_call_operand.hbm [shape: f32[8,640], index: 2, kind: input, shape index: {}]
  %s3 = inlined_call_operand.vmem [shape: f32[8,1], index: 3, kind: output, shape index: {}]
  %s4 = sld [smem:[#allocation0]]
  $region34: #{tpu_custom_call.1} parent=0
    _
  %s6 = ssub.s32 1, %s4
  %s7 = scalar_select 0, %s6, %s4
  $region1: #{tpu_custom_call.1} parent=0
    #allocation2 [shape = 'u8[4096]{0}', space=vmem, size = 0x1000, scoped, tag = 'input window, operand 0, single buffered']
    #allocation3 [shape = 's32[1]{0}', space=sflag, size = 0x4, scoped, tag = 'scoped memory for tpu_custom_call.1']
    #allocation4 [shape = 'u8[4096]{0}', space=vmem, size = 0x1000, scoped, tag = 'input window, operand 1, single buffered']
    #allocation5 [shape = 's32[1]{0}', space=sflag, size = 0x4, scoped, tag = 'scoped memory for tpu_custom_call.1']
    #allocation6 [shape = 'u8[20480]{0}', space=vmem, size = 0x5000, scoped, tag = 'input window, operand 2, single buffered']
    %8 = vsyncpa [#allocation3], 0
    %9 = vsyncpa [#allocation5], 0
    // Predicated region
    $region2: #{tpu_custom_call.1} parent=1 // pred_check
      _
    $region3: #{tpu_custom_call.1} parent=1 // pred_check_branch
      %11 = sbr.rel (0) target = $region5
    $region4: #{tpu_custom_call.1} parent=1 // pred_region
      %13 = vsyncadd [#allocation3], 0
      %s15 = sshll.u32 %s0, 4
      %s16 = int_to_ptr.hbm [resolvable:$true] %s15
      %s17 = sshll.u32 [#allocation2], 4
      %s18 = int_to_ptr.vmem [resolvable:$true] %s17
      %20 = dma.hbm_to_vmem [thread:$0]  %s16, 128, %s18, [#allocation3]
    $region5: #{tpu_custom_call.1} parent=1 // pred_fallthru
      _
    // Predicated region
    $region6: #{tpu_custom_call.1} parent=1 // pred_check
      _
    $region7: #{tpu_custom_call.1} parent=1 // pred_check_branch
      %22 = sbr.rel (0) target = $region9
    $region8: #{tpu_custom_call.1} parent=1 // pred_region
      %24 = vsyncadd [#allocation5], 0
      %s26 = sshll.u32 %s1, 4
      %s27 = int_to_ptr.hbm [resolvable:$true] %s26
      %s28 = sshll.u32 [#allocation4], 4
      %s29 = int_to_ptr.vmem [resolvable:$true] %s28
      %31 = dma.hbm_to_vmem [thread:$0]  %s27, 128, %s29, [#allocation5]
    $region9: #{tpu_custom_call.1} parent=1 // pred_fallthru
      _
    // Predicated region
    $region10: #{tpu_custom_call.1} parent=1 // pred_check
      _
    $region11: #{tpu_custom_call.1} parent=1 // pred_check_branch
      %33 = sbr.rel (0) target = $region13
    $region12: #{tpu_custom_call.1} parent=1 // pred_region
      %35 = vsyncadd [#allocation5], 0
      %s37 = sshll.u32 %s2, 4
      %s38 = int_to_ptr.hbm [resolvable:$true] %s37
      %s39 = sshll.u32 [#allocation6], 4
      %s40 = int_to_ptr.vmem [resolvable:$true] %s39
      %42 = dma.hbm_to_vmem [thread:$0]  %s38, 640, %s40, [#allocation5]
    $region13: #{tpu_custom_call.1} parent=1 // pred_fallthru
      _
    // Predicated region
    $region14: #{tpu_custom_call.1} parent=1 // pred_check
      _
    $region15: #{tpu_custom_call.1} parent=1 // pred_check_branch
      %44 = sbr.rel (0) target = $region17
    $region16: #{tpu_custom_call.1} parent=1 // pred_region
      %46 = dma.done [#allocation3], 128
    $region17: #{tpu_custom_call.1} parent=1 // pred_fallthru
      _
    // Predicated region
    $region18: #{tpu_custom_call.1} parent=1 // pred_check
      _
    $region19: #{tpu_custom_call.1} parent=1 // pred_check_branch
      %48 = sbr.rel (0) target = $region21
    $region20: #{tpu_custom_call.1} parent=1 // pred_region
      %50 = dma.done [#allocation5], 128
    $region21: #{tpu_custom_call.1} parent=1 // pred_fallthru
      _
    // Predicated region
    $region22: #{tpu_custom_call.1} parent=1 // pred_check
      _
    $region23: #{tpu_custom_call.1} parent=1 // pred_check_branch
      %52 = sbr.rel (0) target = $region25
    $region24: #{tpu_custom_call.1} parent=1 // pred_region
      %54 = dma.done [#allocation5], 640
    $region25: #{tpu_custom_call.1} parent=1 // pred_fallthru
      _
    %v55 = vld [vmem:[#allocation2] sm:$0xff]
    %v56 = vld [vmem:[#allocation4] sm:$0xff]
    %v57 = vmul.f32 %v56, %v55
    %58 = vadd.xlane.f32.xlu0 %v57
    %v59 = vpop.xlane.xlu0 %58
    %v60 = vld [vmem:[#allocation6] sm:$0xff]
    %v61 = vmul.f32 %v60, %v55
    %62 = vadd.xlane.f32.xlu0 %v61
    %v63 = vpop.xlane.xlu0 %62
    %v64 = vsub.f32 0.0, %v63
    %v65 = vld [vmem:[#allocation6 + $0x8] sm:$0xff]
    %v66 = vmul.f32 %v65, %v55
    %67 = vadd.xlane.f32.xlu0 %v66
    %v68 = vpop.xlane.xlu0 %67
    %v69 = vsub.f32 0.0, %v68
    %v70 = vld [vmem:[#allocation6 + $0x10] sm:$0xff]
    %v71 = vmul.f32 %v70, %v55
    %72 = vadd.xlane.f32.xlu0 %v71
    %v73 = vpop.xlane.xlu0 %72
    %v74 = vsub.f32 0.0, %v73
    %v75 = vld [vmem:[#allocation6 + $0x18] sm:$0xff]
    %v76 = vmul.f32 %v75, %v55
    %77 = vadd.xlane.f32.xlu0 %v76
    %v78 = vpop.xlane.xlu0 %77
    %v79 = vsub.f32 0.0, %v78
    %v80 = vld [vmem:[#allocation6 + $0x20] sm:$0xff]
    %v81 = vmul.f32 %v80, %v55
    %82 = vadd.xlane.f32.xlu0 %v81
    %v83 = vpop.xlane.xlu0 %82
    %v84 = vsub.f32 0.0, %v83
    %vm85 = vcmask 7168
    %v86 = vsel %vm85, %v59, %v64
    %vm87 = vcmask 15360
    %v88 = vsel %vm87, %v86, %v69
    %vm89 = vcmask 23552
    %v90 = vsel %vm89, %v88, %v74
    %vm91 = vcmask 31744
    %v92 = vsel %vm91, %v90, %v79
    %vm93 = vcmask 39936
    %v94 = vsel %vm93, %v92, %v84
    %v95 = vmin.f32 %v94, 0.0
    %v96 = vand.u32 2147483647, %v94
    %v97 = vsub.f32 0.0, %v96
    %v98 = vmul.f32 %v97, 1.442695
    %v99 = vpow.pop %v98
    %v100 = vadd.f32 %v99, 1.0
    %v101 = vlog2.pop %v100
    %v102 = vmul.f32 %v101, 0.6931472
    %v103 = vsub.f32 %v95, %v102
    %vm104 = vcmask 48128
    %v105 = vsel %vm104, %v103, 0.0
    %106 = vadd.xlane.f32.xlu0 %v105
    %v107 = vpop.xlane.xlu0 %106
    %108 = vst.msk [vmem:[%s3] sm:$0xff] %vm85, %v107
    // Predicated region
    $region26: #{tpu_custom_call.1} parent=1 // pred_check
      _
    $region27: #{tpu_custom_call.1} parent=1 // pred_check_branch
      %110 = sbr.rel (0) target = $region29
    $region28: #{tpu_custom_call.1} parent=1 // pred_region
      _
    $region29: #{tpu_custom_call.1} parent=1 // pred_fallthru
      _
    // Predicated region
    $region30: #{tpu_custom_call.1} parent=1 // pred_check
      _
    $region31: #{tpu_custom_call.1} parent=1 // pred_check_branch
      %112 = sbr.rel (0) target = $region33
    $region32: #{tpu_custom_call.1} parent=1 // pred_region
      _
    $region33: #{tpu_custom_call.1} parent=1 // pred_fallthru
      _
    %113 = vsyncpa [#allocation3], 1
    %114 = vsyncpa [#allocation5], 1

</llo_original>
